<compile_context>
chip_gen: v5e
topology: v5e:2x2
jax: 0.10.0
libtpu: 0.0.40
codegen_flags: <defaults>
</compile_context>

<pallas_src>
import functools

import jax
import jax.numpy as jnp
from jax import lax
from jax.experimental import pallas as pl
from jax.experimental.pallas import tpu as pltpu


# ----------------------------------------------------------------------------
# Fused kernel.  Grid = (B,).  Each step sees one batch element's full sequence
# plus the (VMEM-resident) fused weights and writes the final projected output
# and the attention probabilities for every head of that batch element.
# ----------------------------------------------------------------------------
def _fused_attn_kernel(x_ref, wqkv_ref, wo_ref, bo_ref, out_ref, attn_ref,
                       *, heads, dim_head):
    # TODO(synk): optional additive `mask` argument not wired through (module default is None).
    x = x_ref[0]                                  # (N, Din)
    wqkv = wqkv_ref[...]                          # (Din, 3*H*Dh), scale pre-folded into Q cols
    inner = heads * dim_head
    n = x.shape[0]
    dout = wo_ref.shape[1]

    # Single wide projection for q, k, v of all heads (one MXU pass, 3*inner lanes).
    qkv = jnp.dot(x, wqkv, preferred_element_type=jnp.float32)   # (N, 3*H*Dh)

    # Accumulator for the fused head-merge + output projection, seeded with the bias.
    acc = jnp.zeros((n, dout), jnp.float32) + bo_ref[...]        # (N, Dout)

    for h in range(heads):                        # static unroll (H is small)
        q = qkv[:, h * dim_head:(h + 1) * dim_head]                          # (N, Dh), pre-scaled
        k = qkv[:, inner + h * dim_head: inner + (h + 1) * dim_head]         # (N, Dh)
        v = qkv[:, 2 * inner + h * dim_head: 2 * inner + (h + 1) * dim_head] # (N, Dh)

        # q @ k^T without materializing a transpose of k.
        dots = lax.dot_general(q, k, (((1,), (1,)), ((), ())),
                               preferred_element_type=jnp.float32)           # (N, N)

        # Numerically-stable softmax; divide replaced by the EUP reciprocal (free slot).
        m = jnp.max(dots, axis=-1, keepdims=True)
        e = jnp.exp(dots - m)
        s = jnp.sum(e, axis=-1, keepdims=True)
        attn = e * pl.reciprocal(s, approx=True)                             # (N, N)

        attn_ref[0, h] = attn.astype(attn_ref.dtype)

        head_out = jnp.dot(attn, v, preferred_element_type=jnp.float32)      # (N, Dh)
        # merged @ Wo == sum_h head_out_h @ Wo[h*Dh:(h+1)*Dh, :]  (no lane concat needed)
        acc = acc + jnp.dot(head_out, wo_ref[h * dim_head:(h + 1) * dim_head, :],
                            preferred_element_type=jnp.float32)

    out_ref[0] = acc.astype(out_ref.dtype)


def prepare_attention1d_params(params, *, heads, dim_head):
    """One-time parameter prep: fold the softmax scale into the Q columns of Wqkv."""
    inner = heads * dim_head
    scale = float(dim_head) ** -0.5
    wqkv_scaled = params["wqkv"].at[:, :inner].multiply(scale)
    return {"wqkv": wqkv_scaled, "wo": params["wo"], "bo": params["bo"]}


def attention1d_forward(x, prepared_params, *, heads, dim_head):
    """Pallas implementation of Attention1d.forward(x, mask=None).

    Returns (out, attn) with out: (B, N, dim_out), attn: (B, H, N, N).
    `prepared_params` must come from prepare_attention1d_params.
    """
    B, N, Din = x.shape
    wqkv = prepared_params["wqkv"]   # (Din, 3*inner)
    wo = prepared_params["wo"]       # (inner, Dout)
    bo = prepared_params["bo"]       # (1, Dout)
    inner = heads * dim_head
    Dout = wo.shape[1]

    kernel = functools.partial(_fused_attn_kernel, heads=heads, dim_head=dim_head)

    out, attn = pl.pallas_call(
        kernel,
        out_shape=(
            jax.ShapeDtypeStruct((B, N, Dout), jnp.float32),
            jax.ShapeDtypeStruct((B, heads, N, N), jnp.float32),
        ),
        grid_spec=pltpu.PrefetchScalarGridSpec(
            num_scalar_prefetch=0,
            grid=(B,),
            in_specs=[
                pl.BlockSpec((1, N, Din), lambda b: (b, 0, 0)),
                # Weight block indices never change across the grid -> kept VMEM-resident.
                pl.BlockSpec((Din, 3 * inner), lambda b: (0, 0)),
                pl.BlockSpec((inner, Dout), lambda b: (0, 0)),
                pl.BlockSpec((1, Dout), lambda b: (0, 0)),
            ],
            out_specs=[
                pl.BlockSpec((1, N, Dout), lambda b: (b, 0, 0)),
                pl.BlockSpec((1, heads, N, N), lambda b: (b, 0, 0, 0)),
            ],
        ),
        compiler_params=pltpu.CompilerParams(
            dimension_semantics=("parallel",),
        ),
    )(x, wqkv, wo, bo)

    return out, attn


def _reference(x, raw_params, heads, dim_head):
    """Plain-JAX reference matching the PyTorch forward semantics (uses unscaled Wqkv)."""
    wqkv, wo, bo = raw_params["wqkv"], raw_params["wo"], raw_params["bo"]
    B, N, _ = x.shape
    inner = heads * dim_head
    scale = float(dim_head) ** -0.5

    qkv = x @ wqkv                                      # (B, N, 3*inner)
    q, k, v = jnp.split(qkv, 3, axis=-1)

    def to_heads(t):                                    # 'b n (h d) -> b h n d'
        return jnp.transpose(t.reshape(B, N, heads, dim_head), (0, 2, 1, 3))

    q, k, v = map(to_heads, (q, k, v))
    dots = jnp.einsum("bhid,bhjd->bhij", q, k) * scale
    attn = jax.nn.softmax(dots, axis=-1)
    out = jnp.einsum("bhij,bhjd->bhid", attn, v)
    out = jnp.transpose(out, (0, 2, 1, 3)).reshape(B, N, inner)
    out = out @ wo + bo
    return out, attn


if __name__ == "__main__":
    # Small shapes consistent with the module's forward:
    #   x: (b, n, dim_in), heads=2, dim_head=16 -> inner=32, dim_out=dim_in=32
    B, N, DIM_IN = 2, 8, 32
    HEADS, DIM_HEAD = 2, 16
    INNER = HEADS * DIM_HEAD
    DIM_OUT = DIM_IN

    key = jax.random.PRNGKey(0)
    kx, kqkv, ko, kb = jax.random.split(key, 4)

    x = jax.random.normal(kx, (B, N, DIM_IN), dtype=jnp.float32)

    # Parameters stored pre-transposed: wqkv == nn.Linear(dim_in, 3*inner).weight.T
    # (columns ordered [q_heads | k_heads | v_heads], each head a Dh-wide slab),
    # wo == nn.Linear(inner, dim_out).weight.T, bo == its bias.
    params = {
        "wqkv": 0.05 * jax.random.normal(kqkv, (DIM_IN, 3 * INNER), dtype=jnp.float32),
        "wo": 0.05 * jax.random.normal(ko, (INNER, DIM_OUT), dtype=jnp.float32),
        "bo": 0.05 * jax.random.normal(kb, (1, DIM_OUT), dtype=jnp.float32),
    }
    prepared = prepare_attention1d_params(params, heads=HEADS, dim_head=DIM_HEAD)

    out, attn = attention1d_forward(x, prepared, heads=HEADS, dim_head=DIM_HEAD)
    out = jax.block_until_ready(out)
    attn = jax.block_until_ready(attn)

    ref_out, ref_attn = _reference(x, params, HEADS, DIM_HEAD)
    assert out.shape == (B, N, DIM_OUT)
    assert attn.shape == (B, HEADS, N, N)
    # Tolerance accounts for the approximate EUP reciprocal (vrcp, ~2^-12 rel err)
    # used in the softmax normalization.
    assert jnp.allclose(attn, ref_attn, atol=1e-3, rtol=1e-3), float(jnp.max(jnp.abs(attn - ref_attn)))
    assert jnp.allclose(out, ref_out, atol=1e-3, rtol=1e-3), float(jnp.max(jnp.abs(out - ref_out)))

    print("KERNEL_OK")
</pallas_src>

<mosaic_0001>
module attributes {stable_mosaic.version = 11 : i64} {
  func.func @_fused_attn_kernel(%arg0: i32, %arg1: memref<1x8x32xf32, #tpu.memory_space<vmem>>, %arg2: memref<32x96xf32, #tpu.memory_space<vmem>>, %arg3: memref<32x32xf32, #tpu.memory_space<vmem>>, %arg4: memref<1x32xf32, #tpu.memory_space<vmem>>, %arg5: memref<1x8x32xf32, #tpu.memory_space<vmem>>, %arg6: memref<1x2x8x8xf32, #tpu.memory_space<vmem>>) attributes {dimension_semantics = [#tpu.dimension_semantics<parallel>], iteration_bounds = array<i64: 2>, scalar_prefetch = 0 : i64, scratch_operands = 0 : i64, tpu.core_type = #tpu.core_type<tc>, window_params = [{transform_indices = @transform_0, window_bounds = array<i64: 1, 8, 32>}, {pipeline_mode = #tpu.pipeline_mode<synchronous>, transform_indices = @transform_1, window_bounds = array<i64: 32, 96>}, {pipeline_mode = #tpu.pipeline_mode<synchronous>, transform_indices = @transform_2, window_bounds = array<i64: 32, 32>}, {pipeline_mode = #tpu.pipeline_mode<synchronous>, transform_indices = @transform_3, window_bounds = array<i64: 1, 32>}, {transform_indices = @transform_4, window_bounds = array<i64: 1, 8, 32>}, {transform_indices = @transform_5, window_bounds = array<i64: 1, 2, 8, 8>}]} {
    %c0 = arith.constant 0 : index
    %c0_0 = arith.constant 0 : index
    %c0_1 = arith.constant 0 : index
    %0 = vector.load %arg1[%c0, %c0_0, %c0_1] : memref<1x8x32xf32, #tpu.memory_space<vmem>>, vector<1x8x32xf32>
    %1 = vector.shape_cast %0 : vector<1x8x32xf32> to vector<8x32xf32>
    %c0_2 = arith.constant 0 : index
    %c0_3 = arith.constant 0 : index
    %2 = vector.load %arg2[%c0_2, %c0_3] : memref<32x96xf32, #tpu.memory_space<vmem>>, vector<32x96xf32>
    %cst = arith.constant dense<0.000000e+00> : vector<8x96xf32>
    %3 = tpu.matmul %1, %2, %cst {dimension_numbers = #tpu.dot_dimension_numbers<[1], [0], [0], [1], [0, 0, 1, 1], [], []>} : vector<8x32xf32>, vector<32x96xf32>, vector<8x96xf32> -> vector<8x96xf32>
    %cst_4 = arith.constant 0.000000e+00 : f32
    %4 = vector.broadcast %cst_4 : f32 to vector<8x32xf32>
    %c0_5 = arith.constant 0 : index
    %c0_6 = arith.constant 0 : index
    %5 = vector.load %arg4[%c0_5, %c0_6] : memref<1x32xf32, #tpu.memory_space<vmem>>, vector<1x32xf32>
    %6 = vector.broadcast %5 : vector<1x32xf32> to vector<8x32xf32>
    %7 = arith.addf %4, %6 : vector<8x32xf32>
    %8 = vector.extract_strided_slice %3 {offsets = [0, 0], sizes = [8, 16], strides = [1, 1]} : vector<8x96xf32> to vector<8x16xf32>
    %9 = vector.extract_strided_slice %3 {offsets = [0, 32], sizes = [8, 16], strides = [1, 1]} : vector<8x96xf32> to vector<8x16xf32>
    %10 = vector.extract_strided_slice %3 {offsets = [0, 64], sizes = [8, 16], strides = [1, 1]} : vector<8x96xf32> to vector<8x16xf32>
    %cst_7 = arith.constant dense<0.000000e+00> : vector<8x8xf32>
    %11 = tpu.matmul %8, %9, %cst_7 {dimension_numbers = #tpu.dot_dimension_numbers<[1], [1], [0], [0], [0, 0, 1, 0], [], []>} : vector<8x16xf32>, vector<8x16xf32>, vector<8x8xf32> -> vector<8x8xf32>
    %cst_8 = arith.constant dense<0xFF800000> : vector<8xf32>
    %12 = vector.multi_reduction <maximumf>, %11, %cst_8 [1] : vector<8x8xf32> to vector<8xf32>
    %13 = vector.shape_cast %12 : vector<8xf32> to vector<8x1xf32>
    %14 = vector.broadcast %13 : vector<8x1xf32> to vector<8x8xf32>
    %15 = arith.subf %11, %14 : vector<8x8xf32>
    %16 = math.exp %15 : vector<8x8xf32>
    %cst_9 = arith.constant dense<0.000000e+00> : vector<8xf32>
    %17 = vector.multi_reduction <add>, %16, %cst_9 [1] : vector<8x8xf32> to vector<8xf32>
    %18 = vector.shape_cast %17 : vector<8xf32> to vector<8x1xf32>
    %19 = tpu.reciprocal %18 {approx = true} : vector<8x1xf32> -> vector<8x1xf32>
    %20 = vector.broadcast %19 : vector<8x1xf32> to vector<8x8xf32>
    %21 = arith.mulf %16, %20 : vector<8x8xf32>
    %c0_10 = arith.constant 0 : index
    %c0_11 = arith.constant 0 : index
    %c0_12 = arith.constant 0 : index
    %c0_13 = arith.constant 0 : index
    %22 = vector.load %arg6[%c0_10, %c0_11, %c0_12, %c0_13] : memref<1x2x8x8xf32, #tpu.memory_space<vmem>>, vector<1x1x8x8xf32>
    %23 = vector.shape_cast %22 : vector<1x1x8x8xf32> to vector<8x8xf32>
    %24 = vector.shape_cast %21 : vector<8x8xf32> to vector<1x1x8x8xf32>
    tpu.vector_store %arg6[%c0_10, %c0_11, %c0_12, %c0_13], %24 {strides = array<i32>} : memref<1x2x8x8xf32, #tpu.memory_space<vmem>>, vector<1x1x8x8xf32>,
    %cst_14 = arith.constant dense<0.000000e+00> : vector<8x16xf32>
    %25 = tpu.matmul %21, %10, %cst_14 {dimension_numbers = #tpu.dot_dimension_numbers<[1], [0], [0], [1], [0, 0, 1, 1], [], []>} : vector<8x8xf32>, vector<8x16xf32>, vector<8x16xf32> -> vector<8x16xf32>
    %c0_15 = arith.constant 0 : index
    %c0_16 = arith.constant 0 : index
    %26 = vector.load %arg3[%c0_15, %c0_16] : memref<32x32xf32, #tpu.memory_space<vmem>>, vector<16x32xf32>
    %cst_17 = arith.constant dense<0.000000e+00> : vector<8x32xf32>
    %27 = tpu.matmul %25, %26, %cst_17 {dimension_numbers = #tpu.dot_dimension_numbers<[1], [0], [0], [1], [0, 0, 1, 1], [], []>} : vector<8x16xf32>, vector<16x32xf32>, vector<8x32xf32> -> vector<8x32xf32>
    %28 = arith.addf %7, %27 : vector<8x32xf32>
    %29 = vector.extract_strided_slice %3 {offsets = [0, 16], sizes = [8, 16], strides = [1, 1]} : vector<8x96xf32> to vector<8x16xf32>
    %30 = vector.extract_strided_slice %3 {offsets = [0, 48], sizes = [8, 16], strides = [1, 1]} : vector<8x96xf32> to vector<8x16xf32>
    %31 = vector.extract_strided_slice %3 {offsets = [0, 80], sizes = [8, 16], strides = [1, 1]} : vector<8x96xf32> to vector<8x16xf32>
    %cst_18 = arith.constant dense<0.000000e+00> : vector<8x8xf32>
    %32 = tpu.matmul %29, %30, %cst_18 {dimension_numbers = #tpu.dot_dimension_numbers<[1], [1], [0], [0], [0, 0, 1, 0], [], []>} : vector<8x16xf32>, vector<8x16xf32>, vector<8x8xf32> -> vector<8x8xf32>
    %cst_19 = arith.constant dense<0xFF800000> : vector<8xf32>
    %33 = vector.multi_reduction <maximumf>, %32, %cst_19 [1] : vector<8x8xf32> to vector<8xf32>
    %34 = vector.shape_cast %33 : vector<8xf32> to vector<8x1xf32>
    %35 = vector.broadcast %34 : vector<8x1xf32> to vector<8x8xf32>
    %36 = arith.subf %32, %35 : vector<8x8xf32>
    %37 = math.exp %36 : vector<8x8xf32>
    %cst_20 = arith.constant dense<0.000000e+00> : vector<8xf32>
    %38 = vector.multi_reduction <add>, %37, %cst_20 [1] : vector<8x8xf32> to vector<8xf32>
    %39 = vector.shape_cast %38 : vector<8xf32> to vector<8x1xf32>
    %40 = tpu.reciprocal %39 {approx = true} : vector<8x1xf32> -> vector<8x1xf32>
    %41 = vector.broadcast %40 : vector<8x1xf32> to vector<8x8xf32>
    %42 = arith.mulf %37, %41 : vector<8x8xf32>
    %c0_21 = arith.constant 0 : index
    %c1 = arith.constant 1 : index
    %c0_22 = arith.constant 0 : index
    %c0_23 = arith.constant 0 : index
    %43 = vector.load %arg6[%c0_21, %c1, %c0_22, %c0_23] : memref<1x2x8x8xf32, #tpu.memory_space<vmem>>, vector<1x1x8x8xf32>
    %44 = vector.shape_cast %43 : vector<1x1x8x8xf32> to vector<8x8xf32>
    %45 = vector.shape_cast %42 : vector<8x8xf32> to vector<1x1x8x8xf32>
    tpu.vector_store %arg6[%c0_21, %c1, %c0_22, %c0_23], %45 {strides = array<i32>} : memref<1x2x8x8xf32, #tpu.memory_space<vmem>>, vector<1x1x8x8xf32>,
    %cst_24 = arith.constant dense<0.000000e+00> : vector<8x16xf32>
    %46 = tpu.matmul %42, %31, %cst_24 {dimension_numbers = #tpu.dot_dimension_numbers<[1], [0], [0], [1], [0, 0, 1, 1], [], []>} : vector<8x8xf32>, vector<8x16xf32>, vector<8x16xf32> -> vector<8x16xf32>
    %c16 = arith.constant 16 : index
    %c0_25 = arith.constant 0 : index
    %47 = vector.load %arg3[%c16, %c0_25] : memref<32x32xf32, #tpu.memory_space<vmem>>, vector<16x32xf32>
    %cst_26 = arith.constant dense<0.000000e+00> : vector<8x32xf32>
    %48 = tpu.matmul %46, %47, %cst_26 {dimension_numbers = #tpu.dot_dimension_numbers<[1], [0], [0], [1], [0, 0, 1, 1], [], []>} : vector<8x16xf32>, vector<16x32xf32>, vector<8x32xf32> -> vector<8x32xf32>
    %49 = arith.addf %28, %48 : vector<8x32xf32>
    %c0_27 = arith.constant 0 : index
    %c0_28 = arith.constant 0 : index
    %c0_29 = arith.constant 0 : index
    %50 = vector.load %arg5[%c0_27, %c0_28, %c0_29] : memref<1x8x32xf32, #tpu.memory_space<vmem>>, vector<1x8x32xf32>
    %51 = vector.shape_cast %50 : vector<1x8x32xf32> to vector<8x32xf32>
    %52 = vector.shape_cast %49 : vector<8x32xf32> to vector<1x8x32xf32>
    tpu.vector_store %arg5[%c0_27, %c0_28, %c0_29], %52 {strides = array<i32>} : memref<1x8x32xf32, #tpu.memory_space<vmem>>, vector<1x8x32xf32>,
    return
  }
  func.func @transform_0(%arg0: i32) -> (i32, i32, i32) {
    %c0_i32 = arith.constant 0 : i32
    %c0_i32_0 = arith.constant 0 : i32
    %c0_i32_1 = arith.constant 0 : i32
    return %arg0, %c0_i32, %c0_i32_0 : i32, i32, i32
  }
  func.func @transform_1(%arg0: i32) -> (i32, i32) {
    %c0_i32 = arith.constant 0 : i32
    %c0_i32_0 = arith.constant 0 : i32
    %c0_i32_1 = arith.constant 0 : i32
    return %c0_i32, %c0_i32_0 : i32, i32
  }
  func.func @transform_2(%arg0: i32) -> (i32, i32) {
    %c0_i32 = arith.constant 0 : i32
    %c0_i32_0 = arith.constant 0 : i32
    %c0_i32_1 = arith.constant 0 : i32
    return %c0_i32, %c0_i32_0 : i32, i32
  }
  func.func @transform_3(%arg0: i32) -> (i32, i32) {
    %c0_i32 = arith.constant 0 : i32
    %c0_i32_0 = arith.constant 0 : i32
    %c0_i32_1 = arith.constant 0 : i32
    return %c0_i32, %c0_i32_0 : i32, i32
  }
  func.func @transform_4(%arg0: i32) -> (i32, i32, i32) {
    %c0_i32 = arith.constant 0 : i32
    %c0_i32_0 = arith.constant 0 : i32
    %c0_i32_1 = arith.constant 0 : i32
    return %arg0, %c0_i32, %c0_i32_0 : i32, i32, i32
  }
  func.func @transform_5(%arg0: i32) -> (i32, i32, i32, i32) {
    %c0_i32 = arith.constant 0 : i32
    %c0_i32_0 = arith.constant 0 : i32
    %c0_i32_1 = arith.constant 0 : i32
    %c0_i32_2 = arith.constant 0 : i32
    return %arg0, %c0_i32, %c0_i32_0, %c0_i32_1 : i32, i32, i32, i32
  }
}

</mosaic_0001>

<llo_original>
// kernel: tpu_custom_call.1
$region0: #{tpu_custom_call.1}
  #allocation0 [shape = 'u32[]', space=smem, size = 0x4, offset = 0x4, fixed_abs, tag = 'smem constant byte address 0x4 - core index']
  #allocation1 [shape = 'u32[72,128]{1,0:T(1,128)}', space=vmem, size = 0x9000, scoped, tag = 'internal scratch']
  %s0 = inlined_call_operand.hbm [shape: f32[2,8,32], index: 0, kind: input, shape index: {}]
  %s1 = inlined_call_operand.hbm [shape: f32[32,96], index: 1, kind: input, shape index: {}]
  %s2 = inlined_call_operand.hbm [shape: f32[32,32], index: 2, kind: input, shape index: {}]
  %s3 = inlined_call_operand.vmem [shape: f32[1,32], index: 3, kind: input, shape index: {}]
  %s4 = inlined_call_operand.hbm [shape: f32[2,8,32], index: 4, kind: output, shape index: {0}]
  %s5 = inlined_call_operand.hbm [shape: f32[2,2,8,8], index: 5, kind: output, shape index: {1}]
  %6 = xla_tuple %s4, %s5
  %s7 = sld [smem:[#allocation0]]
  $region69: #{tpu_custom_call.1} parent=0
    _
  %s9 = ssub.s32 1, %s7
  %s10 = scalar_select 0, %s9, %s7
  $region1: #{tpu_custom_call.1} parent=0
    #allocation2 [shape = 'u8[8192]{0}', space=vmem, size = 0x2000, scoped, tag = 'input window, operand 0']
    #allocation3 [shape = 's32[2]{0}', space=sflag, size = 0x8, scoped, tag = 'scoped memory for tpu_custom_call.1']
    #allocation4 [shape = 's32[2]{0}', space=sflag, size = 0x8, scoped, tag = 'scoped memory for tpu_custom_call.1']
    #allocation5 [shape = 'u8[16384]{0}', space=vmem, size = 0x4000, scoped, tag = 'input window, operand 1, single buffered']
    #allocation6 [shape = 's32[1]{0}', space=sflag, size = 0x4, scoped, tag = 'scoped memory for tpu_custom_call.1']
    #allocation7 [shape = 'u8[16384]{0}', space=vmem, size = 0x4000, scoped, tag = 'input window, operand 2, single buffered']
    #allocation8 [shape = 'u8[8192]{0}', space=vmem, size = 0x2000, scoped, tag = 'output window, operand 0']
    #allocation9 [shape = 'u8[16384]{0}', space=vmem, size = 0x4000, scoped, tag = 'output window, operand 1']
    #allocation10 [shape = 's32[2]{0}', space=sflag, size = 0x8, scoped, tag = 'scoped memory for tpu_custom_call.1']
    %11 = vsyncpa [#allocation3], 0
    %s12 = scalar_lea.sflag [#allocation3], 1
    %13 = vsyncpa %s12, 0
    %14 = vsyncpa [#allocation6], 0
    %15 = vsyncpa [#allocation4], 0
    %s16 = scalar_lea.sflag [#allocation4], 1
    %17 = vsyncpa %s16, 0
    %18 = vsyncpa [#allocation10], 0
    %s19 = scalar_lea.sflag [#allocation10], 1
    %20 = vsyncpa %s19, 0
    loop: start=0, step=1, limit=4
    $region2: #{tpu_custom_call.1} parent=1 // loop_pre_header
      _
    $region3: #{tpu_custom_call.1} parent=1 // loop_header
      %s22 = sphi 0, %s26
      %p23 = scmp.ge.s32.totalorder %s22, 4
      %s32 = sphi 0, %s34
      %s35 = sphi 0, %s32
      %s36 = sphi 0, %s35
      %s52 = sphi 0, %s36
      %s56 = sphi 0, %s56
      %s58 = sphi 0, %s56
      %s59 = sphi 0, %s58
      %s73 = sphi 0, %s59
      %s77 = sphi 0, %s77
      %s79 = sphi 0, %s77
      %s80 = sphi 0, %s79
      %s94 = sphi 0, %s80
      %s98 = sphi 0, %s98
      %s100 = sphi 0, %s98
      %s101 = sphi 0, %s100
      %s115 = sphi 0, %s101
      %s121 = sphi 0, %s123
      %s124 = sphi 0, %s121
      %s125 = sphi 0, %s124
      %s141 = sphi 0, %s125
      %s147 = sphi 0, %s149
      %s150 = sphi 0, %s147
      %s151 = sphi 0, %s150
      %s167 = sphi 0, %s151
    $region4: #{tpu_custom_call.1} parent=1 // loop_header_branch
      %25 = sbr.rel (%p23) target = $region8
    $region5: #{tpu_custom_call.1} parent=1 // loop_body
      %s27 = ssub.s32 %s22, 1
      %s28 = ssub.s32 %s22, 2
      %s29 = sadd.s32 %s22, 1
      %s30 = ssub.s32 %s22, %s29
      %p31 = scmp.eq.s32.totalorder %s30, 0
      %s33 = sadd.s32 %s32, 1
      %s34 = scalar_select %p31, %s32, %s33
      %p37 = pneg %p31
      %p38 = scmp.eq.s32.totalorder %s22, 1
      %p39 = por %p37, %p38
      %p40 = scmp.ne.s32.totalorder %s32, %s35
      %p41 = scmp.eq.s32.totalorder %s22, 0
      %p42 = por %p40, %p41
      %p43 = scmp.ne.s32.totalorder %s32, %s35
      %p44 = scmp.eq.s32.totalorder %s27, 1
      %p45 = por %p43, %p44
      %p46 = scmp.ne.s32.totalorder %s35, %s36
      %p47 = scmp.eq.s32.totalorder %s27, 0
      %p48 = por %p46, %p47
      %p49 = scmp.ne.s32.totalorder %s35, %s36
      %p50 = scmp.eq.s32.totalorder %s28, 1
      %p51 = por %p49, %p50
      %p53 = scmp.ne.s32.totalorder %s36, %s52
      %p54 = scmp.eq.s32.totalorder %s28, 0
      %p55 = por %p53, %p54
      %s57 = sadd.s32 %s56, 1
      %p60 = scmp.eq.s32.totalorder %s22, 1
      %p61 = scmp.ne.s32.totalorder %s56, %s58
      %p62 = scmp.eq.s32.totalorder %s22, 0
      %p63 = por %p61, %p62
      %p64 = scmp.ne.s32.totalorder %s56, %s58
      %p65 = scmp.eq.s32.totalorder %s27, 1
      %p66 = por %p64, %p65
      %p67 = scmp.ne.s32.totalorder %s58, %s59
      %p68 = scmp.eq.s32.totalorder %s27, 0
      %p69 = por %p67, %p68
      %p70 = scmp.ne.s32.totalorder %s58, %s59
      %p71 = scmp.eq.s32.totalorder %s28, 1
      %p72 = por %p70, %p71
      %p74 = scmp.ne.s32.totalorder %s59, %s73
      %p75 = scmp.eq.s32.totalorder %s28, 0
      %p76 = por %p74, %p75
      %s78 = sadd.s32 %s77, 1
      %p81 = scmp.eq.s32.totalorder %s22, 1
      %p82 = scmp.ne.s32.totalorder %s77, %s79
      %p83 = scmp.eq.s32.totalorder %s22, 0
      %p84 = por %p82, %p83
      %p85 = scmp.ne.s32.totalorder %s77, %s79
      %p86 = scmp.eq.s32.totalorder %s27, 1
      %p87 = por %p85, %p86
      %p88 = scmp.ne.s32.totalorder %s79, %s80
      %p89 = scmp.eq.s32.totalorder %s27, 0
      %p90 = por %p88, %p89
      %p91 = scmp.ne.s32.totalorder %s79, %s80
      %p92 = scmp.eq.s32.totalorder %s28, 1
      %p93 = por %p91, %p92
      %p95 = scmp.ne.s32.totalorder %s80, %s94
      %p96 = scmp.eq.s32.totalorder %s28, 0
      %p97 = por %p95, %p96
      %s99 = sadd.s32 %s98, 1
      %p102 = scmp.eq.s32.totalorder %s22, 1
      %p103 = scmp.ne.s32.totalorder %s98, %s100
      %p104 = scmp.eq.s32.totalorder %s22, 0
      %p105 = por %p103, %p104
      %p106 = scmp.ne.s32.totalorder %s98, %s100
      %p107 = scmp.eq.s32.totalorder %s27, 1
      %p108 = por %p106, %p107
      %p109 = scmp.ne.s32.totalorder %s100, %s101
      %p110 = scmp.eq.s32.totalorder %s27, 0
      %p111 = por %p109, %p110
      %p112 = scmp.ne.s32.totalorder %s100, %s101
      %p113 = scmp.eq.s32.totalorder %s28, 1
      %p114 = por %p112, %p113
      %p116 = scmp.ne.s32.totalorder %s101, %s115
      %p117 = scmp.eq.s32.totalorder %s28, 0
      %p118 = por %p116, %p117
      %s119 = ssub.s32 %s22, %s29
      %p120 = scmp.eq.s32.totalorder %s119, 0
      %s122 = sadd.s32 %s121, 1
      %s123 = scalar_select %p120, %s121, %s122
      %p126 = pneg %p120
      %p127 = scmp.eq.s32.totalorder %s22, 1
      %p128 = por %p126, %p127
      %p129 = scmp.ne.s32.totalorder %s121, %s124
      %p130 = scmp.eq.s32.totalorder %s22, 0
      %p131 = por %p129, %p130
      %p132 = scmp.ne.s32.totalorder %s121, %s124
      %p133 = scmp.eq.s32.totalorder %s27, 1
      %p134 = por %p132, %p133
      %p135 = scmp.ne.s32.totalorder %s124, %s125
      %p136 = scmp.eq.s32.totalorder %s27, 0
      %p137 = por %p135, %p136
      %p138 = scmp.ne.s32.totalorder %s124, %s125
      %p139 = scmp.eq.s32.totalorder %s28, 1
      %p140 = por %p138, %p139
      %p142 = scmp.ne.s32.totalorder %s125, %s141
      %p143 = scmp.eq.s32.totalorder %s28, 0
      %p144 = por %p142, %p143
      %s145 = ssub.s32 %s22, %s29
      %p146 = scmp.eq.s32.totalorder %s145, 0
      %s148 = sadd.s32 %s147, 1
      %s149 = scalar_select %p146, %s147, %s148
      %p152 = pneg %p146
      %p153 = scmp.eq.s32.totalorder %s22, 1
      %p154 = por %p152, %p153
      %p155 = scmp.ne.s32.totalorder %s147, %s150
      %p156 = scmp.eq.s32.totalorder %s22, 0
      %p157 = por %p155, %p156
      %p158 = scmp.ne.s32.totalorder %s147, %s150
      %p159 = scmp.eq.s32.totalorder %s27, 1
      %p160 = por %p158, %p159
      %p161 = scmp.ne.s32.totalorder %s150, %s151
      %p162 = scmp.eq.s32.totalorder %s27, 0
      %p163 = por %p161, %p162
      %p164 = scmp.ne.s32.totalorder %s150, %s151
      %p165 = scmp.eq.s32.totalorder %s28, 1
      %p166 = por %p164, %p165
      %p168 = scmp.ne.s32.totalorder %s151, %s167
      %p169 = scmp.eq.s32.totalorder %s28, 0
      %p170 = por %p168, %p169
      %p171 = scmp.le.s32.totalorder 1, %s22
      %p172 = scmp.lt.s32.totalorder %s22, 3
      %p173 = pnand %p171, %p172
      %p174 = pneg %p173
      // Predicated region
      $region9: #{tpu_custom_call.1} parent=5 // pred_check
        _
      $region10: #{tpu_custom_call.1} parent=5 // pred_check_branch
        %176 = sbr.rel (%p173) target = $region12
      $region11: #{tpu_custom_call.1} parent=5 // pred_region
        %s177 = ssub.s32 %s22, 1
        // Predicated region
        $region13: #{tpu_custom_call.1} parent=11 // pred_check
          %p178 = pneg %p69
        $region14: #{tpu_custom_call.1} parent=11 // pred_check_branch
          %180 = sbr.rel (%p178) target = $region16
        $region15: #{tpu_custom_call.1} parent=11 // pred_region
          %182 = vsyncadd [#allocation6], 0
          %s183 = sshll.u32 %s1, 4
          %s184 = int_to_ptr.hbm [resolvable:$true] %s183
          %s185 = sshll.u32 [#allocation5], 4
          %s186 = int_to_ptr.vmem [resolvable:$true] %s185
          %191 = dma.hbm_to_vmem [thread:$0]  %s184, 512, %s186, [#allocation6], 128, 128, 8
        $region16: #{tpu_custom_call.1} parent=11 // pred_fallthru
          _
        // Predicated region
        $region17: #{tpu_custom_call.1} parent=11 // pred_check
          %p192 = pneg %p90
        $region18: #{tpu_custom_call.1} parent=11 // pred_check_branch
          %194 = sbr.rel (%p192) target = $region20
        $region19: #{tpu_custom_call.1} parent=11 // pred_region
          %196 = vsyncadd [#allocation6], 0
          %s197 = sshll.u32 %s2, 4
          %s198 = int_to_ptr.hbm [resolvable:$true] %s197
          %s199 = sshll.u32 [#allocation7], 4
          %s200 = int_to_ptr.vmem [resolvable:$true] %s199
          %205 = dma.hbm_to_vmem [thread:$0]  %s198, 512, %s200, [#allocation6], 128, 128, 8
        $region20: #{tpu_custom_call.1} parent=11 // pred_fallthru
          _
        // Predicated region
        $region21: #{tpu_custom_call.1} parent=11 // pred_check
          %p206 = pneg %p111
        $region22: #{tpu_custom_call.1} parent=11 // pred_check_branch
          %208 = sbr.rel (%p206) target = $region24
        $region23: #{tpu_custom_call.1} parent=11 // pred_region
          _
        $region24: #{tpu_custom_call.1} parent=11 // pred_fallthru
          _
      $region12: #{tpu_custom_call.1} parent=5 // pred_fallthru
        _
      %p209 = scmp.lt.s32.totalorder %s22, 2
      // Predicated region
      $region25: #{tpu_custom_call.1} parent=5 // pred_check
        %p210 = pneg %p209
      $region26: #{tpu_custom_call.1} parent=5 // pred_check_branch
        %212 = sbr.rel (%p210) target = $region28
      $region27: #{tpu_custom_call.1} parent=5 // pred_region
        // Predicated region
        $region29: #{tpu_custom_call.1} parent=27 // pred_check
          %p213 = pneg %p42
        $region30: #{tpu_custom_call.1} parent=27 // pred_check_branch
          %215 = sbr.rel (%p213) target = $region32
        $region31: #{tpu_custom_call.1} parent=27 // pred_region
          %s216 = sand.u32 %s32, 1
          %s217 = scalar_lea.sflag [#allocation3], %s216
          %s218 = sand.u32 %s32, 1
          %s219 = smul.addr %s218, 8
          %s220 = scalar_lea.vmem [#allocation2], %s219
          %222 = vsyncadd %s217, 0
          %s223 = smul.addr %s22, 8
          %s224 = scalar_lea.hbm %s0, %s223
          %s226 = sshll.u32 %s224, 4
          %s227 = int_to_ptr.hbm [resolvable:$true] %s226
          %s228 = sshll.u32 %s220, 4
          %s229 = int_to_ptr.vmem [resolvable:$true] %s228
          %231 = dma.hbm_to_vmem [thread:$0]  %s227, 128, %s229, %s217
        $region32: #{tpu_custom_call.1} parent=27 // pred_fallthru
          _
      $region28: #{tpu_custom_call.1} parent=5 // pred_fallthru
        _
      %p232 = scmp.le.s32.totalorder 1, %s22
      %p233 = scmp.lt.s32.totalorder %s22, 3
      %p234 = pnand %p232, %p233
      %p235 = pneg %p234
      // Predicated region
      $region33: #{tpu_custom_call.1} parent=5 // pred_check
        _
      $region34: #{tpu_custom_call.1} parent=5 // pred_check_branch
        %237 = sbr.rel (%p234) target = $region36
      $region35: #{tpu_custom_call.1} parent=5 // pred_region
        %s238 = ssub.s32 %s22, 1
        %s239 = sand.u32 %s35, 1
        %s240 = scalar_lea.sflag [#allocation3], %s239
        %s241 = sand.u32 %s35, 1
        %s242 = smul.addr %s241, 8
        %s243 = scalar_lea.vmem [#allocation2], %s242
        // Predicated region
        $region37: #{tpu_custom_call.1} parent=35 // pred_check
          %p244 = pneg %p48
        $region38: #{tpu_custom_call.1} parent=35 // pred_check_branch
          %246 = sbr.rel (%p244) target = $region40
        $region39: #{tpu_custom_call.1} parent=35 // pred_region
          %248 = dma.done %s240, 128
        $region40: #{tpu_custom_call.1} parent=35 // pred_fallthru
          _
        // Predicated region
        $region41: #{tpu_custom_call.1} parent=35 // pred_check
          %p249 = pneg %p69
        $region42: #{tpu_custom_call.1} parent=35 // pred_check_branch
          %251 = sbr.rel (%p249) target = $region44
        $region43: #{tpu_custom_call.1} parent=35 // pred_region
          %253 = dma.done [#allocation6], 512
        $region44: #{tpu_custom_call.1} parent=35 // pred_fallthru
          _
        // Predicated region
        $region45: #{tpu_custom_call.1} parent=35 // pred_check
          %p254 = pneg %p90
        $region46: #{tpu_custom_call.1} parent=35 // pred_check_branch
          %256 = sbr.rel (%p254) target = $region48
        $region47: #{tpu_custom_call.1} parent=35 // pred_region
          %258 = dma.done [#allocation6], 512
        $region48: #{tpu_custom_call.1} parent=35 // pred_fallthru
          _
        %s259 = sand.u32 %s35, 1
        %s260 = scalar_lea.sflag [#allocation3], %s259
        %s261 = sand.u32 %s35, 1
        %s262 = smul.addr %s261, 8
        %s263 = scalar_lea.vmem [#allocation2], %s262
        %p264 = pneg %p48
        %p265 = pneg %p45
        %p266 = pneg %p69
        %p267 = pneg %p66
        %p268 = pneg %p90
        %p269 = pneg %p87
        %p270 = pneg %p111
        %p271 = pneg %p108
        %p272 = pneg %p137
        %p273 = pneg %p134
        %s274 = sand.u32 %s124, 1
        %s275 = scalar_lea.sflag [#allocation4], %s274
        %s276 = sand.u32 %s124, 1
        %s277 = smul.addr %s276, 8
        %s278 = scalar_lea.vmem [#allocation8], %s277
        %p279 = pneg %p163
        %p280 = pneg %p160
        %s281 = sand.u32 %s150, 1
        %s282 = scalar_lea.sflag [#allocation10], %s281
        %s283 = sand.u32 %s150, 1
        %s284 = smul.addr %s283, 16
        %s285 = scalar_lea.vmem [#allocation9], %s284
        %v286 = vld [vmem:[%s243] sm:$0xff]
        %v287 = vld [vmem:[#allocation5] sm:$0xff]
        %v288 = vld [vmem:[#allocation5 + $0x8] sm:$0xff]
        %v289 = vld [vmem:[#allocation5 + $0x10] sm:$0xff]
        %v290 = vld [vmem:[#allocation5 + $0x18] sm:$0xff]
        %vm291 = vcmask 261120
        %v293 = vsel %vm291, %v286, 0
        %295 = vmatpush.msra.mxu0 0.0
        %296 = vmatpush.msra.mxu0 0.0
        %297 = vmatpush.msra.mxu0 0.0
        %298 = vmatpush.msra.mxu0 0.0
        %299 = vmatpush.msra.mxu0 0.0
        %300 = vmatpush.msra.mxu0 0.0
        %301 = vmatpush.msra.mxu0 0.0
        %302 = vmatpush.msra.mxu0 0.0
        %303 = vmatpush.msra.mxu0 0.0
        %304 = vmatpush.msra.mxu0 0.0
        %305 = vmatpush.msra.mxu0 0.0
        %306 = vmatpush.msra.mxu0 0.0
        %307 = vmatpush.msra.mxu0 %v290
        %308 = vmatpush.msra.mxu0 %v289
        %309 = vmatpush.msra.mxu0 %v288
        %310 = vmatpush.msra.mxu0 %v287
        %311 = vmatmul.f32.gmra.mxu0 %v293
        %v312 = vpop.f32.mrf.mxu0
        %v313 = vadd.f32 0.0, %v312
        %314 = vdwg.mxu0
        %v315 = vld [vmem:[%s3] sm:$0x1]
        %v317 = vperm.slane %v315, 0
        %v319 = vadd.f32 %v317, 0.0
        %321 = vrot.lane.b32.xlu0 %v313, 96
        %v322 = vpop.permute.xlu0 %321
        %vm323 = vcmask 130048
        %v324 = vsel %vm323, %v313, 0
        %v326 = vsel %vm323, %v322, 0
        %328 = vmatpush.xpose.msra.mxu0 0.0
        %329 = vmatpush.xpose.msra.mxu0 0.0
        %330 = vmatpush.xpose.msra.mxu0 0.0
        %331 = vmatpush.xpose.msra.mxu0 0.0
        %332 = vmatpush.xpose.msra.mxu0 0.0
        %333 = vmatpush.xpose.msra.mxu0 0.0
        %334 = vmatpush.xpose.msra.mxu0 0.0
        %335 = vmatpush.xpose.msra.mxu0 0.0
        %336 = vmatpush.xpose.msra.mxu0 0.0
        %337 = vmatpush.xpose.msra.mxu0 0.0
        %338 = vmatpush.xpose.msra.mxu0 0.0
        %339 = vmatpush.xpose.msra.mxu0 0.0
        %340 = vmatpush.xpose.msra.mxu0 0.0
        %341 = vmatpush.xpose.msra.mxu0 0.0
        %342 = vmatpush.xpose.msra.mxu0 0.0
        %343 = vmatpush.xpose.msra.mxu0 %v326
        %344 = vmatmul.f32.gmra.mxu0 %v324
        %v345 = vpop.f32.mrf.mxu0
        %v346 = vadd.f32 0.0, %v345
        %347 = vdwg.mxu0
        %vm348 = vcmask 64512
        %v349 = vsel %vm348, %v346, -inf
        %350 = vmax.xlane.f32.xlu0 %v349
        %v351 = vpop.xlane.xlu0 %350
        %v352 = vsub.f32 %v346, %v351
        %v353 = vmul.f32 %v352, 1.442695
        %v354 = vpow.pop %v353
        %v355 = vsel %vm348, %v354, 0.0
        %356 = vadd.xlane.f32.xlu0 %v355
        %v357 = vpop.xlane.xlu0 %356
        %v358 = vrcp.pop %v357
        %v359 = vmul.f32 %v354, %v358
        %360 = vst.msk [vmem:[%s285] sm:$0xff] %vm348, %v359
        %361 = vrot.lane.b32.xlu0 %v313, 64
        %v362 = vpop.permute.xlu0 %361
        %v365 = vsel %vm348, %v359, 0
        %367 = vmatpush.msra.mxu0 0.0
        %368 = vmatpush.msra.mxu0 0.0
        %369 = vmatpush.msra.mxu0 0.0
        %370 = vmatpush.msra.mxu0 0.0
        %371 = vmatpush.msra.mxu0 0.0
        %372 = vmatpush.msra.mxu0 0.0
        %373 = vmatpush.msra.mxu0 0.0
        %374 = vmatpush.msra.mxu0 0.0
        %375 = vmatpush.msra.mxu0 0.0
        %376 = vmatpush.msra.mxu0 0.0
        %377 = vmatpush.msra.mxu0 0.0
        %378 = vmatpush.msra.mxu0 0.0
        %379 = vmatpush.msra.mxu0 0.0
        %380 = vmatpush.msra.mxu0 0.0
        %381 = vmatpush.msra.mxu0 0.0
        %382 = vmatpush.msra.mxu0 %v362
        %383 = vmatmul.f32.gmra.mxu0 %v365
        %v384 = vpop.f32.mrf.mxu0
        %v385 = vadd.f32 0.0, %v384
        %386 = vdwg.mxu0
        %v387 = vld [vmem:[#allocation7] sm:$0xff]
        %v388 = vld [vmem:[#allocation7 + $0x8] sm:$0xff]
        %v390 = vsel %vm323, %v385, 0
        %392 = vmatpush.msra.mxu0 0.0
        %393 = vmatpush.msra.mxu0 0.0
        %394 = vmatpush.msra.mxu0 0.0
        %395 = vmatpush.msra.mxu0 0.0
        %396 = vmatpush.msra.mxu0 0.0
        %397 = vmatpush.msra.mxu0 0.0
        %398 = vmatpush.msra.mxu0 0.0
        %399 = vmatpush.msra.mxu0 0.0
        %400 = vmatpush.msra.mxu0 0.0
        %401 = vmatpush.msra.mxu0 0.0
        %402 = vmatpush.msra.mxu0 0.0
        %403 = vmatpush.msra.mxu0 0.0
        %404 = vmatpush.msra.mxu0 0.0
        %405 = vmatpush.msra.mxu0 0.0
        %406 = vmatpush.msra.mxu0 %v388
        %407 = vmatpush.msra.mxu0 %v387
        %408 = vmatmul.f32.gmra.mxu0 %v390
        %v409 = vpop.f32.mrf.mxu0
        %v410 = vadd.f32 0.0, %v409
        %411 = vdwg.mxu0
        %v412 = vadd.f32 %v319, %v410
        %413 = vrot.lane.b32.xlu0 %v313, 112
        %v414 = vpop.permute.xlu0 %413
        %415 = vrot.lane.b32.xlu0 %v313, 80
        %v416 = vpop.permute.xlu0 %415
        %v417 = vsel %vm323, %v414, 0
        %v419 = vsel %vm323, %v416, 0
        %421 = vmatpush.xpose.msra.mxu0 0.0
        %422 = vmatpush.xpose.msra.mxu0 0.0
        %423 = vmatpush.xpose.msra.mxu0 0.0
        %424 = vmatpush.xpose.msra.mxu0 0.0
        %425 = vmatpush.xpose.msra.mxu0 0.0
        %426 = vmatpush.xpose.msra.mxu0 0.0
        %427 = vmatpush.xpose.msra.mxu0 0.0
        %428 = vmatpush.xpose.msra.mxu0 0.0
        %429 = vmatpush.xpose.msra.mxu0 0.0
        %430 = vmatpush.xpose.msra.mxu0 0.0
        %431 = vmatpush.xpose.msra.mxu0 0.0
        %432 = vmatpush.xpose.msra.mxu0 0.0
        %433 = vmatpush.xpose.msra.mxu0 0.0
        %434 = vmatpush.xpose.msra.mxu0 0.0
        %435 = vmatpush.xpose.msra.mxu0 0.0
        %436 = vmatpush.xpose.msra.mxu0 %v419
        %437 = vmatmul.f32.gmra.mxu0 %v417
        %v438 = vpop.f32.mrf.mxu0
        %v439 = vadd.f32 0.0, %v438
        %440 = vdwg.mxu0
        %v441 = vsel %vm348, %v439, -inf
        %442 = vmax.xlane.f32.xlu0 %v441
        %v443 = vpop.xlane.xlu0 %442
        %v444 = vsub.f32 %v439, %v443
        %v445 = vmul.f32 %v444, 1.442695
        %v446 = vpow.pop %v445
        %v447 = vsel %vm348, %v446, 0.0
        %448 = vadd.xlane.f32.xlu0 %v447
        %v449 = vpop.xlane.xlu0 %448
        %v450 = vrcp.pop %v449
        %v451 = vmul.f32 %v446, %v450
        %s452 = scalar_lea.vmem %s285, 8 [#allocation9]
        %453 = vst.msk [vmem:[%s452] sm:$0xff] %vm348, %v451
        %454 = vrot.lane.b32.xlu0 %v313, 48
        %v455 = vpop.permute.xlu0 %454
        %v458 = vsel %vm348, %v451, 0
        %460 = vmatpush.msra.mxu0 0.0
        %461 = vmatpush.msra.mxu0 0.0
        %462 = vmatpush.msra.mxu0 0.0
        %463 = vmatpush.msra.mxu0 0.0
        %464 = vmatpush.msra.mxu0 0.0
        %465 = vmatpush.msra.mxu0 0.0
        %466 = vmatpush.msra.mxu0 0.0
        %467 = vmatpush.msra.mxu0 0.0
        %468 = vmatpush.msra.mxu0 0.0
        %469 = vmatpush.msra.mxu0 0.0
        %470 = vmatpush.msra.mxu0 0.0
        %471 = vmatpush.msra.mxu0 0.0
        %472 = vmatpush.msra.mxu0 0.0
        %473 = vmatpush.msra.mxu0 0.0
        %474 = vmatpush.msra.mxu0 0.0
        %475 = vmatpush.msra.mxu0 %v455
        %476 = vmatmul.f32.gmra.mxu0 %v458
        %v477 = vpop.f32.mrf.mxu0
        %v478 = vadd.f32 0.0, %v477
        %479 = vdwg.mxu0
        %v480 = vld [vmem:[#allocation7 + $0x10] sm:$0xff]
        %v481 = vld [vmem:[#allocation7 + $0x18] sm:$0xff]
        %v483 = vsel %vm323, %v478, 0
        %485 = vmatpush.msra.mxu0 0.0
        %486 = vmatpush.msra.mxu0 0.0
        %487 = vmatpush.msra.mxu0 0.0
        %488 = vmatpush.msra.mxu0 0.0
        %489 = vmatpush.msra.mxu0 0.0
        %490 = vmatpush.msra.mxu0 0.0
        %491 = vmatpush.msra.mxu0 0.0
        %492 = vmatpush.msra.mxu0 0.0
        %493 = vmatpush.msra.mxu0 0.0
        %494 = vmatpush.msra.mxu0 0.0
        %495 = vmatpush.msra.mxu0 0.0
        %496 = vmatpush.msra.mxu0 0.0
        %497 = vmatpush.msra.mxu0 0.0
        %498 = vmatpush.msra.mxu0 0.0
        %499 = vmatpush.msra.mxu0 %v481
        %500 = vmatpush.msra.mxu0 %v480
        %501 = vmatmul.f32.gmra.mxu0 %v483
        %v502 = vpop.f32.mrf.mxu0
        %v503 = vadd.f32 0.0, %v502
        %504 = vdwg.mxu0
        %v505 = vadd.f32 %v412, %v503
        %506 = vst.msk [vmem:[%s278] sm:$0xff] %vm291, %v505
        %s507 = sand.u32 %s124, 1
        %s508 = scalar_lea.sflag [#allocation4], %s507
        %s509 = sand.u32 %s124, 1
        %s510 = smul.addr %s509, 8
        %s511 = scalar_lea.vmem [#allocation8], %s510
        %s512 = sand.u32 %s150, 1
        %s513 = scalar_lea.sflag [#allocation10], %s512
        %s514 = sand.u32 %s150, 1
        %s515 = smul.addr %s514, 16
        %s516 = scalar_lea.vmem [#allocation9], %s515
        // Predicated region
        $region49: #{tpu_custom_call.1} parent=35 // pred_check
          %p517 = pneg %p134
        $region50: #{tpu_custom_call.1} parent=35 // pred_check_branch
          %519 = sbr.rel (%p517) target = $region52
        $region51: #{tpu_custom_call.1} parent=35 // pred_region
          %521 = vsyncadd %s508, 0
          %s522 = smul.addr %s27, 8
          %s523 = scalar_lea.hbm %s4, %s522
          %s525 = sshll.u32 %s511, 4
          %s526 = int_to_ptr.vmem [resolvable:$true] %s525
          %s527 = sshll.u32 %s523, 4
          %s528 = int_to_ptr.hbm [resolvable:$true] %s527
          %530 = dma.vmem_to_hbm [thread:$0]  %s526, 128, %s528, %s508
        $region52: #{tpu_custom_call.1} parent=35 // pred_fallthru
          _
        // Predicated region
        $region53: #{tpu_custom_call.1} parent=35 // pred_check
          %p531 = pneg %p160
        $region54: #{tpu_custom_call.1} parent=35 // pred_check_branch
          %533 = sbr.rel (%p531) target = $region56
        $region55: #{tpu_custom_call.1} parent=35 // pred_region
          %535 = vsyncadd %s513, 0
          %s536 = smul.addr %s27, 2
          %s537 = smul.addr %s536, 8
          %s538 = scalar_lea.hbm %s5, %s537
          %s539 = sshll.u32 %s516, 4
          %s540 = int_to_ptr.vmem [resolvable:$true] %s539
          %s541 = sshll.u32 %s538, 4
          %s542 = int_to_ptr.hbm [resolvable:$true] %s541
          %547 = dma.vmem_to_hbm [thread:$0]  %s540, 256, %s542, %s513, 128, 128, 8
        $region56: #{tpu_custom_call.1} parent=35 // pred_fallthru
          _
      $region36: #{tpu_custom_call.1} parent=5 // pred_fallthru
        _
      %p548 = scmp.le.s32.totalorder 2, %s22
      // Predicated region
      $region57: #{tpu_custom_call.1} parent=5 // pred_check
        %p549 = pneg %p548
      $region58: #{tpu_custom_call.1} parent=5 // pred_check_branch
        %551 = sbr.rel (%p549) target = $region60
      $region59: #{tpu_custom_call.1} parent=5 // pred_region
        %s552 = ssub.s32 %s22, 2
        // Predicated region
        $region61: #{tpu_custom_call.1} parent=59 // pred_check
          %p553 = pneg %p140
        $region62: #{tpu_custom_call.1} parent=59 // pred_check_branch
          %555 = sbr.rel (%p553) target = $region64
        $region63: #{tpu_custom_call.1} parent=59 // pred_region
          %s556 = sand.u32 %s125, 1
          %s557 = scalar_lea.sflag [#allocation4], %s556
          %s558 = sand.u32 %s125, 1
          %s559 = smul.addr %s558, 8
          %s560 = scalar_lea.vmem [#allocation8], %s559
          %562 = dma.done %s557, 128
        $region64: #{tpu_custom_call.1} parent=59 // pred_fallthru
          _
        // Predicated region
        $region65: #{tpu_custom_call.1} parent=59 // pred_check
          %p563 = pneg %p166
        $region66: #{tpu_custom_call.1} parent=59 // pred_check_branch
          %565 = sbr.rel (%p563) target = $region68
        $region67: #{tpu_custom_call.1} parent=59 // pred_region
          %s566 = sand.u32 %s151, 1
          %s567 = scalar_lea.sflag [#allocation10], %s566
          %s568 = sand.u32 %s151, 1
          %s569 = smul.addr %s568, 16
          %s570 = scalar_lea.vmem [#allocation9], %s569
          %572 = dma.done %s567, 256
        $region68: #{tpu_custom_call.1} parent=59 // pred_fallthru
          _
      $region60: #{tpu_custom_call.1} parent=5 // pred_fallthru
        _
    $region6: #{tpu_custom_call.1} parent=1 // loop_footer
      %s26 = sadd.s32 1, %s22
    $region7: #{tpu_custom_call.1} parent=1 // loop_footer_branch
      %21 = sbr.rel target = $region3
    $region8: #{tpu_custom_call.1} parent=1 // loop_exit
      _
    %573 = vsyncpa [#allocation3], 1
    %s574 = scalar_lea.sflag [#allocation3], 1
    %575 = vsyncpa %s574, 1
    %576 = vsyncpa [#allocation6], 1
    %577 = vsyncpa [#allocation4], 1
    %s578 = scalar_lea.sflag [#allocation4], 1
    %579 = vsyncpa %s578, 1
    %580 = vsyncpa [#allocation10], 1
    %s581 = scalar_lea.sflag [#allocation10], 1
    %582 = vsyncpa %s581, 1

</llo_original>
